<compile_context>
chip_gen: v7x
topology: tpu7x:2x2x1
jax: 0.10.0
libtpu: 0.0.40
codegen_flags: <defaults>
</compile_context>

<pallas_src>
import functools

import jax
import jax.numpy as jnp
from jax.experimental import pallas as pl
from jax.experimental.pallas import tpu as pltpu


def _batch_norm_kernel(x_ref, gamma_ref, beta_ref, mm_ref, mv_ref,
                       y_ref, new_mm_ref, new_mv_ref, *, eps, moment):
    x = x_ref[...]                                           # (N, TILE_D) f32

    # Per-feature batch statistics (biased variance, matching the module).
    mean = jnp.mean(x, axis=0, keepdims=True)                # (1, TILE_D)
    var = jnp.mean((x - mean) ** 2, axis=0, keepdims=True)   # (1, TILE_D)

    # Fused per-feature scale/bias: y = x * scale + bias.
    inv_std = jax.lax.rsqrt(var + eps)                       # (1, TILE_D), EUP
    scale = gamma_ref[...] * inv_std                         # (1, TILE_D)
    bias = beta_ref[...] - mean * scale                      # (1, TILE_D)
    y_ref[...] = x * scale + bias                            # (N, TILE_D) hot path

    # Running-stat updates stay as tiny (1, TILE_D) vector ops.
    new_mm_ref[...] = mm_ref[...] * moment + (1.0 - moment) * mean
    new_mv_ref[...] = mv_ref[...] * moment + (1.0 - moment) * var


def _pick_tile_d(n, d, vmem_budget_bytes=16 * 1024 * 1024):
    """Largest lane tile (multiple of 128, <=2048) whose double-buffered
    x-in + y-out footprint (~4 * N * TILE_D * 4 bytes) fits the budget."""
    if d <= 128 or d % 128 != 0:
        return d                      # full-extent block (lane constraint OK)
    tile = 128
    while (tile * 2 <= d and d % (tile * 2) == 0 and tile * 2 <= 2048
           and 4 * n * (tile * 2) * 4 <= vmem_budget_bytes):
        tile *= 2
    return tile


def batch_norm(x, gamma, beta, moving_mean, moving_val, eps, moment,
               tile_d=None):
    """Pallas implementation of Batch_N.forward (training path).

    x: (N, D) float32; gamma/beta/moving_mean/moving_val: (1, D) float32.
    Returns (y, new_moving_mean, new_moving_var).
    """
    n, d = x.shape
    if tile_d is None:
        tile_d = _pick_tile_d(n, d)
    grid = (pl.cdiv(d, tile_d),)

    kernel = functools.partial(_batch_norm_kernel,
                               eps=float(eps), moment=float(moment))

    x_spec = pl.BlockSpec((n, tile_d), lambda j: (0, j))
    vec_spec = pl.BlockSpec((1, tile_d), lambda j: (0, j))

    return pl.pallas_call(
        kernel,
        grid=grid,
        in_specs=[x_spec, vec_spec, vec_spec, vec_spec, vec_spec],
        out_specs=(x_spec, vec_spec, vec_spec),
        out_shape=(
            jax.ShapeDtypeStruct((n, d), jnp.float32),
            jax.ShapeDtypeStruct((1, d), jnp.float32),
            jax.ShapeDtypeStruct((1, d), jnp.float32),
        ),
        compiler_params=pltpu.CompilerParams(
            dimension_semantics=("parallel",),
            vmem_limit_bytes=64 * 1024 * 1024,
        ),
    )(x, gamma, beta, moving_mean, moving_val)


def _reference(x, gamma, beta, moving_mean, moving_val, eps, moment):
    mean = x.mean(axis=0, keepdims=True)
    var = ((x - mean) ** 2).mean(axis=0, keepdims=True)
    x_hat = (x - mean) / jnp.sqrt(var + eps)
    y = gamma * x_hat + beta
    new_mm = moving_mean * moment + (1 - moment) * mean
    new_mv = moving_val * moment + (1 - moment) * var
    return y, new_mm, new_mv


if __name__ == "__main__":
    N, D = 8, 256            # small, lane-aligned; tile_d=128 -> 2-step grid
    eps, moment = 1e-5, 0.9

    key = jax.random.PRNGKey(0)
    kx, kg, kb, km, kv = jax.random.split(key, 5)
    x = jax.random.normal(kx, (N, D), dtype=jnp.float32)
    gamma = 1.0 + 0.1 * jax.random.normal(kg, (1, D), dtype=jnp.float32)
    beta = 0.1 * jax.random.normal(kb, (1, D), dtype=jnp.float32)
    moving_mean = 0.05 * jax.random.normal(km, (1, D), dtype=jnp.float32)
    moving_val = jax.random.uniform(kv, (1, D), dtype=jnp.float32,
                                    minval=0.5, maxval=1.5)

    y, new_mm, new_mv = batch_norm(x, gamma, beta, moving_mean, moving_val,
                                   eps, moment, tile_d=128)
    jax.block_until_ready((y, new_mm, new_mv))

    y_ref, mm_ref, mv_ref = _reference(x, gamma, beta, moving_mean,
                                       moving_val, eps, moment)
    assert jnp.allclose(y, y_ref, atol=1e-5, rtol=1e-5)
    assert jnp.allclose(new_mm, mm_ref, atol=1e-6, rtol=1e-6)
    assert jnp.allclose(new_mv, mv_ref, atol=1e-6, rtol=1e-6)

    print("KERNEL_OK")
</pallas_src>

<mosaic_0001>
module attributes {stable_mosaic.version = 11 : i64} {
  func.func @_batch_norm_kernel(%arg0: i32, %arg1: memref<8x128xf32, #tpu.memory_space<vmem>>, %arg2: memref<1x128xf32, #tpu.memory_space<vmem>>, %arg3: memref<1x128xf32, #tpu.memory_space<vmem>>, %arg4: memref<1x128xf32, #tpu.memory_space<vmem>>, %arg5: memref<1x128xf32, #tpu.memory_space<vmem>>, %arg6: memref<8x128xf32, #tpu.memory_space<vmem>>, %arg7: memref<1x128xf32, #tpu.memory_space<vmem>>, %arg8: memref<1x128xf32, #tpu.memory_space<vmem>>) attributes {dimension_semantics = [#tpu.dimension_semantics<parallel>], iteration_bounds = array<i64: 2>, scalar_prefetch = 0 : i64, scratch_operands = 0 : i64, tpu.core_type = #tpu.core_type<tc>, window_params = [{transform_indices = @transform_0, window_bounds = array<i64: 8, 128>}, {transform_indices = @transform_1, window_bounds = array<i64: 1, 128>}, {transform_indices = @transform_2, window_bounds = array<i64: 1, 128>}, {transform_indices = @transform_3, window_bounds = array<i64: 1, 128>}, {transform_indices = @transform_4, window_bounds = array<i64: 1, 128>}, {transform_indices = @transform_5, window_bounds = array<i64: 8, 128>}, {transform_indices = @transform_6, window_bounds = array<i64: 1, 128>}, {transform_indices = @transform_7, window_bounds = array<i64: 1, 128>}]} {
    %c0 = arith.constant 0 : index
    %c0_0 = arith.constant 0 : index
    %0 = vector.load %arg1[%c0, %c0_0] : memref<8x128xf32, #tpu.memory_space<vmem>>, vector<8x128xf32>
    %cst = arith.constant dense<0.000000e+00> : vector<128xf32>
    %1 = vector.multi_reduction <add>, %0, %cst [0] : vector<8x128xf32> to vector<128xf32>
    %2 = vector.shape_cast %1 : vector<128xf32> to vector<1x128xf32>
    %cst_1 = arith.constant 8.000000e+00 : f32
    %3 = vector.broadcast %cst_1 : f32 to vector<1x128xf32>
    %4 = arith.divf %2, %3 : vector<1x128xf32>
    %5 = vector.broadcast %4 : vector<1x128xf32> to vector<8x128xf32>
    %6 = arith.subf %0, %5 : vector<8x128xf32>
    %7 = arith.mulf %6, %6 : vector<8x128xf32>
    %cst_2 = arith.constant dense<0.000000e+00> : vector<128xf32>
    %8 = vector.multi_reduction <add>, %7, %cst_2 [0] : vector<8x128xf32> to vector<128xf32>
    %9 = vector.shape_cast %8 : vector<128xf32> to vector<1x128xf32>
    %cst_3 = arith.constant 8.000000e+00 : f32
    %10 = vector.broadcast %cst_3 : f32 to vector<1x128xf32>
    %11 = arith.divf %9, %10 : vector<1x128xf32>
    %cst_4 = arith.constant 9.99999974E-6 : f32
    %12 = vector.broadcast %cst_4 : f32 to vector<1x128xf32>
    %13 = arith.addf %11, %12 : vector<1x128xf32>
    %14 = math.rsqrt %13 : vector<1x128xf32>
    %c0_5 = arith.constant 0 : index
    %c0_6 = arith.constant 0 : index
    %15 = vector.load %arg2[%c0_5, %c0_6] : memref<1x128xf32, #tpu.memory_space<vmem>>, vector<1x128xf32>
    %16 = arith.mulf %15, %14 : vector<1x128xf32>
    %c0_7 = arith.constant 0 : index
    %c0_8 = arith.constant 0 : index
    %17 = vector.load %arg3[%c0_7, %c0_8] : memref<1x128xf32, #tpu.memory_space<vmem>>, vector<1x128xf32>
    %18 = arith.mulf %4, %16 : vector<1x128xf32>
    %19 = arith.subf %17, %18 : vector<1x128xf32>
    %20 = vector.broadcast %16 : vector<1x128xf32> to vector<8x128xf32>
    %21 = arith.mulf %0, %20 : vector<8x128xf32>
    %22 = vector.broadcast %19 : vector<1x128xf32> to vector<8x128xf32>
    %23 = arith.addf %21, %22 : vector<8x128xf32>
    %c0_9 = arith.constant 0 : index
    %c0_10 = arith.constant 0 : index
    %24 = vector.load %arg6[%c0_9, %c0_10] : memref<8x128xf32, #tpu.memory_space<vmem>>, vector<8x128xf32>
    tpu.vector_store %arg6[%c0_9, %c0_10], %23 {strides = array<i32>} : memref<8x128xf32, #tpu.memory_space<vmem>>, vector<8x128xf32>,
    %c0_11 = arith.constant 0 : index
    %c0_12 = arith.constant 0 : index
    %25 = vector.load %arg4[%c0_11, %c0_12] : memref<1x128xf32, #tpu.memory_space<vmem>>, vector<1x128xf32>
    %cst_13 = arith.constant 0.899999976 : f32
    %26 = vector.broadcast %cst_13 : f32 to vector<1x128xf32>
    %27 = arith.mulf %25, %26 : vector<1x128xf32>
    %cst_14 = arith.constant 1.000000e-01 : f32
    %28 = vector.broadcast %cst_14 : f32 to vector<1x128xf32>
    %29 = arith.mulf %28, %4 : vector<1x128xf32>
    %30 = arith.addf %27, %29 : vector<1x128xf32>
    %c0_15 = arith.constant 0 : index
    %c0_16 = arith.constant 0 : index
    %31 = vector.load %arg7[%c0_15, %c0_16] : memref<1x128xf32, #tpu.memory_space<vmem>>, vector<1x128xf32>
    tpu.vector_store %arg7[%c0_15, %c0_16], %30 {strides = array<i32>} : memref<1x128xf32, #tpu.memory_space<vmem>>, vector<1x128xf32>,
    %c0_17 = arith.constant 0 : index
    %c0_18 = arith.constant 0 : index
    %32 = vector.load %arg5[%c0_17, %c0_18] : memref<1x128xf32, #tpu.memory_space<vmem>>, vector<1x128xf32>
    %cst_19 = arith.constant 0.899999976 : f32
    %33 = vector.broadcast %cst_19 : f32 to vector<1x128xf32>
    %34 = arith.mulf %32, %33 : vector<1x128xf32>
    %cst_20 = arith.constant 1.000000e-01 : f32
    %35 = vector.broadcast %cst_20 : f32 to vector<1x128xf32>
    %36 = arith.mulf %35, %11 : vector<1x128xf32>
    %37 = arith.addf %34, %36 : vector<1x128xf32>
    %c0_21 = arith.constant 0 : index
    %c0_22 = arith.constant 0 : index
    %38 = vector.load %arg8[%c0_21, %c0_22] : memref<1x128xf32, #tpu.memory_space<vmem>>, vector<1x128xf32>
    tpu.vector_store %arg8[%c0_21, %c0_22], %37 {strides = array<i32>} : memref<1x128xf32, #tpu.memory_space<vmem>>, vector<1x128xf32>,
    return
  }
  func.func @transform_0(%arg0: i32) -> (i32, i32) {
    %c0_i32 = arith.constant 0 : i32
    %c0_i32_0 = arith.constant 0 : i32
    return %c0_i32, %arg0 : i32, i32
  }
  func.func @transform_1(%arg0: i32) -> (i32, i32) {
    %c0_i32 = arith.constant 0 : i32
    %c0_i32_0 = arith.constant 0 : i32
    return %c0_i32, %arg0 : i32, i32
  }
  func.func @transform_2(%arg0: i32) -> (i32, i32) {
    %c0_i32 = arith.constant 0 : i32
    %c0_i32_0 = arith.constant 0 : i32
    return %c0_i32, %arg0 : i32, i32
  }
  func.func @transform_3(%arg0: i32) -> (i32, i32) {
    %c0_i32 = arith.constant 0 : i32
    %c0_i32_0 = arith.constant 0 : i32
    return %c0_i32, %arg0 : i32, i32
  }
  func.func @transform_4(%arg0: i32) -> (i32, i32) {
    %c0_i32 = arith.constant 0 : i32
    %c0_i32_0 = arith.constant 0 : i32
    return %c0_i32, %arg0 : i32, i32
  }
  func.func @transform_5(%arg0: i32) -> (i32, i32) {
    %c0_i32 = arith.constant 0 : i32
    %c0_i32_0 = arith.constant 0 : i32
    return %c0_i32, %arg0 : i32, i32
  }
  func.func @transform_6(%arg0: i32) -> (i32, i32) {
    %c0_i32 = arith.constant 0 : i32
    %c0_i32_0 = arith.constant 0 : i32
    return %c0_i32, %arg0 : i32, i32
  }
  func.func @transform_7(%arg0: i32) -> (i32, i32) {
    %c0_i32 = arith.constant 0 : i32
    %c0_i32_0 = arith.constant 0 : i32
    return %c0_i32, %arg0 : i32, i32
  }
}

</mosaic_0001>

<llo_original>
// kernel: tpu_custom_call.1
$region0: #{tpu_custom_call.1}
  #allocation0 [shape = 'u32[]', space=smem, size = 0x4, offset = 0x4, fixed_abs, tag = 'smem constant byte address 0x4 - core index']
  #allocation1 [shape = 'u32[144,128]{1,0:T(1,128)}', space=vmem, size = 0x12000, scoped, tag = 'internal scratch']
  %s0 = inlined_call_operand.hbm [shape: f32[8,256], index: 0, kind: input, shape index: {}]
  %s1 = inlined_call_operand.hbm [shape: f32[1,256], index: 1, kind: input, shape index: {}]
  %s2 = inlined_call_operand.hbm [shape: f32[1,256], index: 2, kind: input, shape index: {}]
  %s3 = inlined_call_operand.hbm [shape: f32[1,256], index: 3, kind: input, shape index: {}]
  %s4 = inlined_call_operand.hbm [shape: f32[1,256], index: 4, kind: input, shape index: {}]
  %s5 = inlined_call_operand.hbm [shape: f32[8,256], index: 5, kind: output, shape index: {0}]
  %s6 = inlined_call_operand.hbm [shape: f32[1,256], index: 6, kind: output, shape index: {1}]
  %s7 = inlined_call_operand.hbm [shape: f32[1,256], index: 7, kind: output, shape index: {2}]
  %8 = xla_tuple %s5, %s6, %s7
  %s9 = sld [smem:[#allocation0]]
  $region89: #{tpu_custom_call.1} parent=0
    _
  %s11 = ssub.s32 1, %s9
  %s12 = scalar_select 0, %s11, %s9
  $region1: #{tpu_custom_call.1} parent=0
    #allocation2 [shape = 'u8[8192]{0}', space=vmem, size = 0x2000, scoped, tag = 'input window, operand 0']
    #allocation3 [shape = 's32[2]{0}', space=sflag, size = 0x8, scoped, tag = 'scoped memory for tpu_custom_call.1']
    #allocation4 [shape = 's32[2]{0}', space=sflag, size = 0x8, scoped, tag = 'scoped memory for tpu_custom_call.1']
    #allocation5 [shape = 'u8[1024]{0}', space=vmem, size = 0x400, scoped, tag = 'input window, operand 1']
    #allocation6 [shape = 's32[2]{0}', space=sflag, size = 0x8, scoped, tag = 'scoped memory for tpu_custom_call.1']
    #allocation7 [shape = 'u8[1024]{0}', space=vmem, size = 0x400, scoped, tag = 'input window, operand 2']
    #allocation8 [shape = 'u8[1024]{0}', space=vmem, size = 0x400, scoped, tag = 'input window, operand 3']
    #allocation9 [shape = 's32[2]{0}', space=sflag, size = 0x8, scoped, tag = 'scoped memory for tpu_custom_call.1']
    #allocation10 [shape = 'u8[1024]{0}', space=vmem, size = 0x400, scoped, tag = 'input window, operand 4']
    #allocation11 [shape = 'u8[8192]{0}', space=vmem, size = 0x2000, scoped, tag = 'output window, operand 0']
    #allocation12 [shape = 'u8[1024]{0}', space=vmem, size = 0x400, scoped, tag = 'output window, operand 1']
    #allocation13 [shape = 's32[2]{0}', space=sflag, size = 0x8, scoped, tag = 'scoped memory for tpu_custom_call.1']
    #allocation14 [shape = 'u8[1024]{0}', space=vmem, size = 0x400, scoped, tag = 'output window, operand 2']
    %13 = vsyncpa [#allocation3], 0
    %s14 = scalar_lea.sflag [#allocation3], 1
    %15 = vsyncpa %s14, 0
    %16 = vsyncpa [#allocation6], 0
    %s17 = scalar_lea.sflag [#allocation6], 1
    %18 = vsyncpa %s17, 0
    %19 = vsyncpa [#allocation9], 0
    %s20 = scalar_lea.sflag [#allocation9], 1
    %21 = vsyncpa %s20, 0
    %22 = vsyncpa [#allocation4], 0
    %s23 = scalar_lea.sflag [#allocation4], 1
    %24 = vsyncpa %s23, 0
    %25 = vsyncpa [#allocation13], 0
    %s26 = scalar_lea.sflag [#allocation13], 1
    %27 = vsyncpa %s26, 0
    loop: start=0, step=1, limit=4
    $region2: #{tpu_custom_call.1} parent=1 // loop_pre_header
      _
    $region3: #{tpu_custom_call.1} parent=1 // loop_header
      %s29 = sphi 0, %s33
      %p30 = scmp.ge.s32.totalorder %s29, 4
      %s39 = sphi 0, %s41
      %s42 = sphi 0, %s39
      %s43 = sphi 0, %s42
      %s59 = sphi 0, %s43
      %s65 = sphi 0, %s67
      %s68 = sphi 0, %s65
      %s69 = sphi 0, %s68
      %s85 = sphi 0, %s69
      %s91 = sphi 0, %s93
      %s94 = sphi 0, %s91
      %s95 = sphi 0, %s94
      %s111 = sphi 0, %s95
      %s117 = sphi 0, %s119
      %s120 = sphi 0, %s117
      %s121 = sphi 0, %s120
      %s137 = sphi 0, %s121
      %s143 = sphi 0, %s145
      %s146 = sphi 0, %s143
      %s147 = sphi 0, %s146
      %s163 = sphi 0, %s147
      %s169 = sphi 0, %s171
      %s172 = sphi 0, %s169
      %s173 = sphi 0, %s172
      %s189 = sphi 0, %s173
      %s195 = sphi 0, %s197
      %s198 = sphi 0, %s195
      %s199 = sphi 0, %s198
      %s215 = sphi 0, %s199
      %s221 = sphi 0, %s223
      %s224 = sphi 0, %s221
      %s225 = sphi 0, %s224
      %s241 = sphi 0, %s225
    $region4: #{tpu_custom_call.1} parent=1 // loop_header_branch
      %32 = sbr.rel (%p30) target = $region8
    $region5: #{tpu_custom_call.1} parent=1 // loop_body
      %s34 = ssub.s32 %s29, 1
      %s35 = ssub.s32 %s29, 2
      %s36 = sadd.s32 %s29, 1
      %s37 = ssub.s32 %s29, %s36
      %p38 = scmp.eq.s32.totalorder %s37, 0
      %s40 = sadd.s32 %s39, 1
      %s41 = scalar_select %p38, %s39, %s40
      %p44 = pneg %p38
      %p45 = scmp.eq.s32.totalorder %s29, 1
      %p46 = por %p44, %p45
      %p47 = scmp.ne.s32.totalorder %s39, %s42
      %p48 = scmp.eq.s32.totalorder %s29, 0
      %p49 = por %p47, %p48
      %p50 = scmp.ne.s32.totalorder %s39, %s42
      %p51 = scmp.eq.s32.totalorder %s34, 1
      %p52 = por %p50, %p51
      %p53 = scmp.ne.s32.totalorder %s42, %s43
      %p54 = scmp.eq.s32.totalorder %s34, 0
      %p55 = por %p53, %p54
      %p56 = scmp.ne.s32.totalorder %s42, %s43
      %p57 = scmp.eq.s32.totalorder %s35, 1
      %p58 = por %p56, %p57
      %p60 = scmp.ne.s32.totalorder %s43, %s59
      %p61 = scmp.eq.s32.totalorder %s35, 0
      %p62 = por %p60, %p61
      %s63 = ssub.s32 %s29, %s36
      %p64 = scmp.eq.s32.totalorder %s63, 0
      %s66 = sadd.s32 %s65, 1
      %s67 = scalar_select %p64, %s65, %s66
      %p70 = pneg %p64
      %p71 = scmp.eq.s32.totalorder %s29, 1
      %p72 = por %p70, %p71
      %p73 = scmp.ne.s32.totalorder %s65, %s68
      %p74 = scmp.eq.s32.totalorder %s29, 0
      %p75 = por %p73, %p74
      %p76 = scmp.ne.s32.totalorder %s65, %s68
      %p77 = scmp.eq.s32.totalorder %s34, 1
      %p78 = por %p76, %p77
      %p79 = scmp.ne.s32.totalorder %s68, %s69
      %p80 = scmp.eq.s32.totalorder %s34, 0
      %p81 = por %p79, %p80
      %p82 = scmp.ne.s32.totalorder %s68, %s69
      %p83 = scmp.eq.s32.totalorder %s35, 1
      %p84 = por %p82, %p83
      %p86 = scmp.ne.s32.totalorder %s69, %s85
      %p87 = scmp.eq.s32.totalorder %s35, 0
      %p88 = por %p86, %p87
      %s89 = ssub.s32 %s29, %s36
      %p90 = scmp.eq.s32.totalorder %s89, 0
      %s92 = sadd.s32 %s91, 1
      %s93 = scalar_select %p90, %s91, %s92
      %p96 = pneg %p90
      %p97 = scmp.eq.s32.totalorder %s29, 1
      %p98 = por %p96, %p97
      %p99 = scmp.ne.s32.totalorder %s91, %s94
      %p100 = scmp.eq.s32.totalorder %s29, 0
      %p101 = por %p99, %p100
      %p102 = scmp.ne.s32.totalorder %s91, %s94
      %p103 = scmp.eq.s32.totalorder %s34, 1
      %p104 = por %p102, %p103
      %p105 = scmp.ne.s32.totalorder %s94, %s95
      %p106 = scmp.eq.s32.totalorder %s34, 0
      %p107 = por %p105, %p106
      %p108 = scmp.ne.s32.totalorder %s94, %s95
      %p109 = scmp.eq.s32.totalorder %s35, 1
      %p110 = por %p108, %p109
      %p112 = scmp.ne.s32.totalorder %s95, %s111
      %p113 = scmp.eq.s32.totalorder %s35, 0
      %p114 = por %p112, %p113
      %s115 = ssub.s32 %s29, %s36
      %p116 = scmp.eq.s32.totalorder %s115, 0
      %s118 = sadd.s32 %s117, 1
      %s119 = scalar_select %p116, %s117, %s118
      %p122 = pneg %p116
      %p123 = scmp.eq.s32.totalorder %s29, 1
      %p124 = por %p122, %p123
      %p125 = scmp.ne.s32.totalorder %s117, %s120
      %p126 = scmp.eq.s32.totalorder %s29, 0
      %p127 = por %p125, %p126
      %p128 = scmp.ne.s32.totalorder %s117, %s120
      %p129 = scmp.eq.s32.totalorder %s34, 1
      %p130 = por %p128, %p129
      %p131 = scmp.ne.s32.totalorder %s120, %s121
      %p132 = scmp.eq.s32.totalorder %s34, 0
      %p133 = por %p131, %p132
      %p134 = scmp.ne.s32.totalorder %s120, %s121
      %p135 = scmp.eq.s32.totalorder %s35, 1
      %p136 = por %p134, %p135
      %p138 = scmp.ne.s32.totalorder %s121, %s137
      %p139 = scmp.eq.s32.totalorder %s35, 0
      %p140 = por %p138, %p139
      %s141 = ssub.s32 %s29, %s36
      %p142 = scmp.eq.s32.totalorder %s141, 0
      %s144 = sadd.s32 %s143, 1
      %s145 = scalar_select %p142, %s143, %s144
      %p148 = pneg %p142
      %p149 = scmp.eq.s32.totalorder %s29, 1
      %p150 = por %p148, %p149
      %p151 = scmp.ne.s32.totalorder %s143, %s146
      %p152 = scmp.eq.s32.totalorder %s29, 0
      %p153 = por %p151, %p152
      %p154 = scmp.ne.s32.totalorder %s143, %s146
      %p155 = scmp.eq.s32.totalorder %s34, 1
      %p156 = por %p154, %p155
      %p157 = scmp.ne.s32.totalorder %s146, %s147
      %p158 = scmp.eq.s32.totalorder %s34, 0
      %p159 = por %p157, %p158
      %p160 = scmp.ne.s32.totalorder %s146, %s147
      %p161 = scmp.eq.s32.totalorder %s35, 1
      %p162 = por %p160, %p161
      %p164 = scmp.ne.s32.totalorder %s147, %s163
      %p165 = scmp.eq.s32.totalorder %s35, 0
      %p166 = por %p164, %p165
      %s167 = ssub.s32 %s29, %s36
      %p168 = scmp.eq.s32.totalorder %s167, 0
      %s170 = sadd.s32 %s169, 1
      %s171 = scalar_select %p168, %s169, %s170
      %p174 = pneg %p168
      %p175 = scmp.eq.s32.totalorder %s29, 1
      %p176 = por %p174, %p175
      %p177 = scmp.ne.s32.totalorder %s169, %s172
      %p178 = scmp.eq.s32.totalorder %s29, 0
      %p179 = por %p177, %p178
      %p180 = scmp.ne.s32.totalorder %s169, %s172
      %p181 = scmp.eq.s32.totalorder %s34, 1
      %p182 = por %p180, %p181
      %p183 = scmp.ne.s32.totalorder %s172, %s173
      %p184 = scmp.eq.s32.totalorder %s34, 0
      %p185 = por %p183, %p184
      %p186 = scmp.ne.s32.totalorder %s172, %s173
      %p187 = scmp.eq.s32.totalorder %s35, 1
      %p188 = por %p186, %p187
      %p190 = scmp.ne.s32.totalorder %s173, %s189
      %p191 = scmp.eq.s32.totalorder %s35, 0
      %p192 = por %p190, %p191
      %s193 = ssub.s32 %s29, %s36
      %p194 = scmp.eq.s32.totalorder %s193, 0
      %s196 = sadd.s32 %s195, 1
      %s197 = scalar_select %p194, %s195, %s196
      %p200 = pneg %p194
      %p201 = scmp.eq.s32.totalorder %s29, 1
      %p202 = por %p200, %p201
      %p203 = scmp.ne.s32.totalorder %s195, %s198
      %p204 = scmp.eq.s32.totalorder %s29, 0
      %p205 = por %p203, %p204
      %p206 = scmp.ne.s32.totalorder %s195, %s198
      %p207 = scmp.eq.s32.totalorder %s34, 1
      %p208 = por %p206, %p207
      %p209 = scmp.ne.s32.totalorder %s198, %s199
      %p210 = scmp.eq.s32.totalorder %s34, 0
      %p211 = por %p209, %p210
      %p212 = scmp.ne.s32.totalorder %s198, %s199
      %p213 = scmp.eq.s32.totalorder %s35, 1
      %p214 = por %p212, %p213
      %p216 = scmp.ne.s32.totalorder %s199, %s215
      %p217 = scmp.eq.s32.totalorder %s35, 0
      %p218 = por %p216, %p217
      %s219 = ssub.s32 %s29, %s36
      %p220 = scmp.eq.s32.totalorder %s219, 0
      %s222 = sadd.s32 %s221, 1
      %s223 = scalar_select %p220, %s221, %s222
      %p226 = pneg %p220
      %p227 = scmp.eq.s32.totalorder %s29, 1
      %p228 = por %p226, %p227
      %p229 = scmp.ne.s32.totalorder %s221, %s224
      %p230 = scmp.eq.s32.totalorder %s29, 0
      %p231 = por %p229, %p230
      %p232 = scmp.ne.s32.totalorder %s221, %s224
      %p233 = scmp.eq.s32.totalorder %s34, 1
      %p234 = por %p232, %p233
      %p235 = scmp.ne.s32.totalorder %s224, %s225
      %p236 = scmp.eq.s32.totalorder %s34, 0
      %p237 = por %p235, %p236
      %p238 = scmp.ne.s32.totalorder %s224, %s225
      %p239 = scmp.eq.s32.totalorder %s35, 1
      %p240 = por %p238, %p239
      %p242 = scmp.ne.s32.totalorder %s225, %s241
      %p243 = scmp.eq.s32.totalorder %s35, 0
      %p244 = por %p242, %p243
      %p245 = scmp.le.s32.totalorder 1, %s29
      %p246 = scmp.lt.s32.totalorder %s29, 3
      %p247 = pnand %p245, %p246
      %p248 = pneg %p247
      // Predicated region
      $region9: #{tpu_custom_call.1} parent=5 // pred_check
        _
      $region10: #{tpu_custom_call.1} parent=5 // pred_check_branch
        %250 = sbr.rel (%p247) target = $region12
      $region11: #{tpu_custom_call.1} parent=5 // pred_region
        %s251 = ssub.s32 %s29, 1
      $region12: #{tpu_custom_call.1} parent=5 // pred_fallthru
        _
      %p252 = scmp.lt.s32.totalorder %s29, 2
      // Predicated region
      $region13: #{tpu_custom_call.1} parent=5 // pred_check
        %p253 = pneg %p252
      $region14: #{tpu_custom_call.1} parent=5 // pred_check_branch
        %255 = sbr.rel (%p253) target = $region16
      $region15: #{tpu_custom_call.1} parent=5 // pred_region
        // Predicated region
        $region17: #{tpu_custom_call.1} parent=15 // pred_check
          %p256 = pneg %p49
        $region18: #{tpu_custom_call.1} parent=15 // pred_check_branch
          %258 = sbr.rel (%p256) target = $region20
        $region19: #{tpu_custom_call.1} parent=15 // pred_region
          %s259 = sand.u32 %s39, 1
          %s260 = scalar_lea.sflag [#allocation3], %s259
          %s261 = sand.u32 %s39, 1
          %s262 = smul.addr %s261, 8
          %s263 = scalar_lea.vmem [#allocation2], %s262
          %s265 = ssub.s32 128, 128
          %266 = vsyncadd %s260, %s265
          %s267 = smul.addr %s29, 128
          %s268 = scalar_lea.hbm %s0, %s267
          %s270 = sshll.u32 %s263, 4
          %s271 = int_to_ptr.vmem [resolvable:$true] %s270
          %273 = dma.hbm_to_vmem [thread:$0]  %s268, 128, %s271, %s260
        $region20: #{tpu_custom_call.1} parent=15 // pred_fallthru
          _
        // Predicated region
        $region21: #{tpu_custom_call.1} parent=15 // pred_check
          %p274 = pneg %p75
        $region22: #{tpu_custom_call.1} parent=15 // pred_check_branch
          %276 = sbr.rel (%p274) target = $region24
        $region23: #{tpu_custom_call.1} parent=15 // pred_region
          %s277 = sand.u32 %s29, 1
          %s278 = scalar_lea.sflag [#allocation6], %s277
          %s279 = sand.u32 %s65, 1
          %s280 = scalar_lea.vmem [#allocation5], %s279
          %s282 = ssub.s32 16, 16
          %283 = vsyncadd %s278, %s282
          %s284 = smul.addr %s29, 16
          %s285 = scalar_lea.hbm %s1, %s284
          %s287 = sshll.u32 %s280, 4
          %s288 = int_to_ptr.vmem [resolvable:$true] %s287
          %290 = dma.hbm_to_vmem [thread:$0]  %s285, 16, %s288, %s278
        $region24: #{tpu_custom_call.1} parent=15 // pred_fallthru
          _
        // Predicated region
        $region25: #{tpu_custom_call.1} parent=15 // pred_check
          %p291 = pneg %p101
        $region26: #{tpu_custom_call.1} parent=15 // pred_check_branch
          %293 = sbr.rel (%p291) target = $region28
        $region27: #{tpu_custom_call.1} parent=15 // pred_region
          %s294 = sand.u32 %s29, 1
          %s295 = scalar_lea.sflag [#allocation6], %s294
          %s296 = sand.u32 %s91, 1
          %s297 = scalar_lea.vmem [#allocation7], %s296
          %s299 = ssub.s32 16, 16
          %300 = vsyncadd %s295, %s299
          %s301 = smul.addr %s29, 16
          %s302 = scalar_lea.hbm %s2, %s301
          %s304 = sshll.u32 %s297, 4
          %s305 = int_to_ptr.vmem [resolvable:$true] %s304
          %307 = dma.hbm_to_vmem [thread:$0]  %s302, 16, %s305, %s295
        $region28: #{tpu_custom_call.1} parent=15 // pred_fallthru
          _
        // Predicated region
        $region29: #{tpu_custom_call.1} parent=15 // pred_check
          %p308 = pneg %p127
        $region30: #{tpu_custom_call.1} parent=15 // pred_check_branch
          %310 = sbr.rel (%p308) target = $region32
        $region31: #{tpu_custom_call.1} parent=15 // pred_region
          %s311 = sand.u32 %s29, 1
          %s312 = scalar_lea.sflag [#allocation9], %s311
          %s313 = sand.u32 %s117, 1
          %s314 = scalar_lea.vmem [#allocation8], %s313
          %s316 = ssub.s32 16, 16
          %317 = vsyncadd %s312, %s316
          %s318 = smul.addr %s29, 16
          %s319 = scalar_lea.hbm %s3, %s318
          %s321 = sshll.u32 %s314, 4
          %s322 = int_to_ptr.vmem [resolvable:$true] %s321
          %324 = dma.hbm_to_vmem [thread:$0]  %s319, 16, %s322, %s312
        $region32: #{tpu_custom_call.1} parent=15 // pred_fallthru
          _
        // Predicated region
        $region33: #{tpu_custom_call.1} parent=15 // pred_check
          %p325 = pneg %p153
        $region34: #{tpu_custom_call.1} parent=15 // pred_check_branch
          %327 = sbr.rel (%p325) target = $region36
        $region35: #{tpu_custom_call.1} parent=15 // pred_region
          %s328 = sand.u32 %s29, 1
          %s329 = scalar_lea.sflag [#allocation9], %s328
          %s330 = sand.u32 %s143, 1
          %s331 = scalar_lea.vmem [#allocation10], %s330
          %s333 = ssub.s32 16, 16
          %334 = vsyncadd %s329, %s333
          %s335 = smul.addr %s29, 16
          %s336 = scalar_lea.hbm %s4, %s335
          %s338 = sshll.u32 %s331, 4
          %s339 = int_to_ptr.vmem [resolvable:$true] %s338
          %341 = dma.hbm_to_vmem [thread:$0]  %s336, 16, %s339, %s329
        $region36: #{tpu_custom_call.1} parent=15 // pred_fallthru
          _
      $region16: #{tpu_custom_call.1} parent=5 // pred_fallthru
        _
      %p342 = scmp.le.s32.totalorder 1, %s29
      %p343 = scmp.lt.s32.totalorder %s29, 3
      %p344 = pnand %p342, %p343
      %p345 = pneg %p344
      // Predicated region
      $region37: #{tpu_custom_call.1} parent=5 // pred_check
        _
      $region38: #{tpu_custom_call.1} parent=5 // pred_check_branch
        %347 = sbr.rel (%p344) target = $region40
      $region39: #{tpu_custom_call.1} parent=5 // pred_region
        %s348 = ssub.s32 %s29, 1
        %s349 = sand.u32 %s42, 1
        %s350 = scalar_lea.sflag [#allocation3], %s349
        %s351 = sand.u32 %s42, 1
        %s352 = smul.addr %s351, 8
        %s353 = scalar_lea.vmem [#allocation2], %s352
        // Predicated region
        $region41: #{tpu_custom_call.1} parent=39 // pred_check
          %p354 = pneg %p55
        $region42: #{tpu_custom_call.1} parent=39 // pred_check_branch
          %356 = sbr.rel (%p354) target = $region44
        $region43: #{tpu_custom_call.1} parent=39 // pred_region
          %357 = dma.done %s350, 128
        $region44: #{tpu_custom_call.1} parent=39 // pred_fallthru
          _
        %s358 = sand.u32 %s34, 1
        %s359 = scalar_lea.sflag [#allocation6], %s358
        %s360 = sand.u32 %s68, 1
        %s361 = scalar_lea.vmem [#allocation5], %s360
        // Predicated region
        $region45: #{tpu_custom_call.1} parent=39 // pred_check
          %p362 = pneg %p81
        $region46: #{tpu_custom_call.1} parent=39 // pred_check_branch
          %364 = sbr.rel (%p362) target = $region48
        $region47: #{tpu_custom_call.1} parent=39 // pred_region
          %365 = dma.done %s359, 16
        $region48: #{tpu_custom_call.1} parent=39 // pred_fallthru
          _
        %s366 = sand.u32 %s34, 1
        %s367 = scalar_lea.sflag [#allocation6], %s366
        %s368 = sand.u32 %s94, 1
        %s369 = scalar_lea.vmem [#allocation7], %s368
        // Predicated region
        $region49: #{tpu_custom_call.1} parent=39 // pred_check
          %p370 = pneg %p107
        $region50: #{tpu_custom_call.1} parent=39 // pred_check_branch
          %372 = sbr.rel (%p370) target = $region52
        $region51: #{tpu_custom_call.1} parent=39 // pred_region
          %373 = dma.done %s367, 16
        $region52: #{tpu_custom_call.1} parent=39 // pred_fallthru
          _
        %s374 = sand.u32 %s34, 1
        %s375 = scalar_lea.sflag [#allocation9], %s374
        %s376 = sand.u32 %s120, 1
        %s377 = scalar_lea.vmem [#allocation8], %s376
        // Predicated region
        $region53: #{tpu_custom_call.1} parent=39 // pred_check
          %p378 = pneg %p133
        $region54: #{tpu_custom_call.1} parent=39 // pred_check_branch
          %380 = sbr.rel (%p378) target = $region56
        $region55: #{tpu_custom_call.1} parent=39 // pred_region
          %381 = dma.done %s375, 16
        $region56: #{tpu_custom_call.1} parent=39 // pred_fallthru
          _
        %s382 = sand.u32 %s34, 1
        %s383 = scalar_lea.sflag [#allocation9], %s382
        %s384 = sand.u32 %s146, 1
        %s385 = scalar_lea.vmem [#allocation10], %s384
        // Predicated region
        $region57: #{tpu_custom_call.1} parent=39 // pred_check
          %p386 = pneg %p159
        $region58: #{tpu_custom_call.1} parent=39 // pred_check_branch
          %388 = sbr.rel (%p386) target = $region60
        $region59: #{tpu_custom_call.1} parent=39 // pred_region
          %389 = dma.done %s383, 16
        $region60: #{tpu_custom_call.1} parent=39 // pred_fallthru
          _
        %s390 = sand.u32 %s42, 1
        %s391 = scalar_lea.sflag [#allocation3], %s390
        %s392 = sand.u32 %s42, 1
        %s393 = smul.addr %s392, 8
        %s394 = scalar_lea.vmem [#allocation2], %s393
        %p395 = pneg %p55
        %p396 = pneg %p52
        %s397 = sand.u32 %s34, 1
        %s398 = scalar_lea.sflag [#allocation6], %s397
        %s399 = sand.u32 %s68, 1
        %s400 = scalar_lea.vmem [#allocation5], %s399
        %p401 = pneg %p81
        %p402 = pneg %p78
        %s403 = sand.u32 %s34, 1
        %s404 = scalar_lea.sflag [#allocation6], %s403
        %s405 = sand.u32 %s94, 1
        %s406 = scalar_lea.vmem [#allocation7], %s405
        %p407 = pneg %p107
        %p408 = pneg %p104
        %s409 = sand.u32 %s34, 1
        %s410 = scalar_lea.sflag [#allocation9], %s409
        %s411 = sand.u32 %s120, 1
        %s412 = scalar_lea.vmem [#allocation8], %s411
        %p413 = pneg %p133
        %p414 = pneg %p130
        %s415 = sand.u32 %s34, 1
        %s416 = scalar_lea.sflag [#allocation9], %s415
        %s417 = sand.u32 %s146, 1
        %s418 = scalar_lea.vmem [#allocation10], %s417
        %p419 = pneg %p159
        %p420 = pneg %p156
        %p421 = pneg %p185
        %p422 = pneg %p182
        %s423 = sand.u32 %s172, 1
        %s424 = scalar_lea.sflag [#allocation4], %s423
        %s425 = sand.u32 %s172, 1
        %s426 = smul.addr %s425, 8
        %s427 = scalar_lea.vmem [#allocation11], %s426
        %p428 = pneg %p211
        %p429 = pneg %p208
        %s430 = sand.u32 %s34, 1
        %s431 = scalar_lea.sflag [#allocation13], %s430
        %s432 = sand.u32 %s198, 1
        %s433 = scalar_lea.vmem [#allocation12], %s432
        %p434 = pneg %p237
        %p435 = pneg %p234
        %s436 = sand.u32 %s34, 1
        %s437 = scalar_lea.sflag [#allocation13], %s436
        %s438 = sand.u32 %s224, 1
        %s439 = scalar_lea.vmem [#allocation14], %s438
        %v440 = vld [vmem:[%s353] sm:$0xff]
        %v441 = vrot.slane %v440, 4
        %v442 = vadd.f32 %v440, %v441
        %v443 = vrot.slane %v442, 2
        %v444 = vadd.f32 %v442, %v443
        %v445 = vrot.slane %v444, 1
        %v446 = vadd.f32 %v444, %v445
        %v447 = vrcp.pop 8.0
        %v448 = vmul.f32 %v446, %v447
        %v449 = vsub.f32 %v440, %v448
        %v450 = vmul.f32 %v449, %v449
        %v451 = vrot.slane %v450, 4
        %v452 = vadd.f32 %v450, %v451
        %v453 = vrot.slane %v452, 2
        %v454 = vadd.f32 %v452, %v453
        %v455 = vrot.slane %v454, 1
        %v456 = vadd.f32 %v454, %v455
        %v457 = vmul.f32 %v456, %v447
        %v458 = vadd.f32 %v457, 1e-05
        %v459 = vrsqrt.pop %v458
        %v460 = vld [vmem:[%s361] sm:$0x1]
        %v461 = vmul.f32 %v460, %v459
        %v462 = vld [vmem:[%s369] sm:$0x1]
        %v463 = vmul.f32 %v448, %v461
        %v464 = vsub.f32 %v462, %v463
        %v466 = vlaneseq
        %v467 = vshrl.u32 %v466, 7
        %v468 = vsub.s32 0, %v467
        %v469 = vrot.slane %v461, %v468
        %v471 = vmul.f32 %v440, %v469
        %v473 = vlaneseq
        %v474 = vshrl.u32 %v473, 7
        %v475 = vsub.s32 0, %v474
        %v476 = vrot.slane %v464, %v475
        %v478 = vadd.f32 %v471, %v476
        %479 = vst [vmem:[%s427] sm:$0xff] %v478
        %v480 = vld [vmem:[%s377] sm:$0x1]
        %v481 = vmul.f32 %v480, 0.9
        %v482 = vmul.f32 %v448, 0.1
        %v483 = vadd.f32 %v481, %v482
        %484 = vst [vmem:[%s433] sm:$0x1] %v483
        %v485 = vld [vmem:[%s385] sm:$0x1]
        %v486 = vmul.f32 %v485, 0.9
        %v487 = vmul.f32 %v457, 0.1
        %v488 = vadd.f32 %v486, %v487
        %489 = vst [vmem:[%s439] sm:$0x1] %v488
        %s490 = sand.u32 %s172, 1
        %s491 = scalar_lea.sflag [#allocation4], %s490
        %s492 = sand.u32 %s172, 1
        %s493 = smul.addr %s492, 8
        %s494 = scalar_lea.vmem [#allocation11], %s493
        %s495 = sand.u32 %s34, 1
        %s496 = scalar_lea.sflag [#allocation13], %s495
        %s497 = sand.u32 %s198, 1
        %s498 = scalar_lea.vmem [#allocation12], %s497
        %s499 = sand.u32 %s34, 1
        %s500 = scalar_lea.sflag [#allocation13], %s499
        %s501 = sand.u32 %s224, 1
        %s502 = scalar_lea.vmem [#allocation14], %s501
        // Predicated region
        $region61: #{tpu_custom_call.1} parent=39 // pred_check
          %p503 = pneg %p182
        $region62: #{tpu_custom_call.1} parent=39 // pred_check_branch
          %505 = sbr.rel (%p503) target = $region64
        $region63: #{tpu_custom_call.1} parent=39 // pred_region
          %s507 = ssub.s32 128, 128
          %508 = vsyncadd %s491, %s507
          %s509 = smul.addr %s34, 128
          %s510 = scalar_lea.hbm %s5, %s509
          %s512 = sshll.u32 %s494, 4
          %s513 = int_to_ptr.vmem [resolvable:$true] %s512
          %515 = dma.vmem_to_hbm [thread:$0]  %s513, 128, %s510, %s491
        $region64: #{tpu_custom_call.1} parent=39 // pred_fallthru
          _
        // Predicated region
        $region65: #{tpu_custom_call.1} parent=39 // pred_check
          %p516 = pneg %p208
        $region66: #{tpu_custom_call.1} parent=39 // pred_check_branch
          %518 = sbr.rel (%p516) target = $region68
        $region67: #{tpu_custom_call.1} parent=39 // pred_region
          %s520 = ssub.s32 16, 16
          %521 = vsyncadd %s496, %s520
          %s522 = smul.addr %s34, 16
          %s523 = scalar_lea.hbm %s6, %s522
          %s525 = sshll.u32 %s498, 4
          %s526 = int_to_ptr.vmem [resolvable:$true] %s525
          %528 = dma.vmem_to_hbm [thread:$0]  %s526, 16, %s523, %s496
        $region68: #{tpu_custom_call.1} parent=39 // pred_fallthru
          _
        // Predicated region
        $region69: #{tpu_custom_call.1} parent=39 // pred_check
          %p529 = pneg %p234
        $region70: #{tpu_custom_call.1} parent=39 // pred_check_branch
          %531 = sbr.rel (%p529) target = $region72
        $region71: #{tpu_custom_call.1} parent=39 // pred_region
          %s533 = ssub.s32 16, 16
          %534 = vsyncadd %s500, %s533
          %s535 = smul.addr %s34, 16
          %s536 = scalar_lea.hbm %s7, %s535
          %s538 = sshll.u32 %s502, 4
          %s539 = int_to_ptr.vmem [resolvable:$true] %s538
          %541 = dma.vmem_to_hbm [thread:$0]  %s539, 16, %s536, %s500
        $region72: #{tpu_custom_call.1} parent=39 // pred_fallthru
          _
      $region40: #{tpu_custom_call.1} parent=5 // pred_fallthru
        _
      %p542 = scmp.le.s32.totalorder 2, %s29
      // Predicated region
      $region73: #{tpu_custom_call.1} parent=5 // pred_check
        %p543 = pneg %p542
      $region74: #{tpu_custom_call.1} parent=5 // pred_check_branch
        %545 = sbr.rel (%p543) target = $region76
      $region75: #{tpu_custom_call.1} parent=5 // pred_region
        %s546 = ssub.s32 %s29, 2
        // Predicated region
        $region77: #{tpu_custom_call.1} parent=75 // pred_check
          %p547 = pneg %p188
        $region78: #{tpu_custom_call.1} parent=75 // pred_check_branch
          %549 = sbr.rel (%p547) target = $region80
        $region79: #{tpu_custom_call.1} parent=75 // pred_region
          %s550 = sand.u32 %s173, 1
          %s551 = scalar_lea.sflag [#allocation4], %s550
          %s552 = sand.u32 %s173, 1
          %s553 = smul.addr %s552, 8
          %s554 = scalar_lea.vmem [#allocation11], %s553
          %555 = dma.done %s551, 128
        $region80: #{tpu_custom_call.1} parent=75 // pred_fallthru
          _
        // Predicated region
        $region81: #{tpu_custom_call.1} parent=75 // pred_check
          %p556 = pneg %p214
        $region82: #{tpu_custom_call.1} parent=75 // pred_check_branch
          %558 = sbr.rel (%p556) target = $region84
        $region83: #{tpu_custom_call.1} parent=75 // pred_region
          %s559 = sand.u32 %s35, 1
          %s560 = scalar_lea.sflag [#allocation13], %s559
          %s561 = sand.u32 %s199, 1
          %s562 = scalar_lea.vmem [#allocation12], %s561
          %563 = dma.done %s560, 16
        $region84: #{tpu_custom_call.1} parent=75 // pred_fallthru
          _
        // Predicated region
        $region85: #{tpu_custom_call.1} parent=75 // pred_check
          %p564 = pneg %p240
        $region86: #{tpu_custom_call.1} parent=75 // pred_check_branch
          %566 = sbr.rel (%p564) target = $region88
        $region87: #{tpu_custom_call.1} parent=75 // pred_region
          %s567 = sand.u32 %s35, 1
          %s568 = scalar_lea.sflag [#allocation13], %s567
          %s569 = sand.u32 %s225, 1
          %s570 = scalar_lea.vmem [#allocation14], %s569
          %571 = dma.done %s568, 16
        $region88: #{tpu_custom_call.1} parent=75 // pred_fallthru
          _
      $region76: #{tpu_custom_call.1} parent=5 // pred_fallthru
        _
    $region6: #{tpu_custom_call.1} parent=1 // loop_footer
      %s33 = sadd.s32 1, %s29
    $region7: #{tpu_custom_call.1} parent=1 // loop_footer_branch
      %28 = sbr.rel target = $region3
    $region8: #{tpu_custom_call.1} parent=1 // loop_exit
      _
    %572 = vsyncpa [#allocation3], 1
    %s573 = scalar_lea.sflag [#allocation3], 1
    %574 = vsyncpa %s573, 1
    %575 = vsyncpa [#allocation6], 1
    %s576 = scalar_lea.sflag [#allocation6], 1
    %577 = vsyncpa %s576, 1
    %578 = vsyncpa [#allocation9], 1
    %s579 = scalar_lea.sflag [#allocation9], 1
    %580 = vsyncpa %s579, 1
    %581 = vsyncpa [#allocation4], 1
    %s582 = scalar_lea.sflag [#allocation4], 1
    %583 = vsyncpa %s582, 1
    %584 = vsyncpa [#allocation13], 1
    %s585 = scalar_lea.sflag [#allocation13], 1
    %586 = vsyncpa %s585, 1

</llo_original>
